<compile_context>
chip_gen: v7x
topology: tpu7x:2x2x1
jax: 0.10.0
libtpu: 0.0.40
codegen_flags: <defaults>
</compile_context>

<pallas_src>
import math
import jax
import jax.numpy as jnp
from jax.experimental import pallas as pl
from jax.experimental.pallas import tpu as pltpu


def fm_kernel(x_ref, rhs_ref, w2_ref, const_ref, o_ref):
    x = x_ref[...]                          # (TB, F)   streamed dtype
    rhs = rhs_ref[...]                      # (F, K+1)  streamed dtype, [W | Wl]
    k = rhs.shape[1] - 1                    # static

    # One fused MXU pass over X:  [X @ W | X @ Wl]
    xw_all = jnp.dot(x, rhs, preferred_element_type=jnp.float32)   # (TB, K+1) f32
    xw = xw_all[:, :k]                      # (TB, K)
    x_lin = xw_all[:, k:]                   # (TB, 1)

    # Collapsed second term: (X*X) @ sum_k(W*W).  Square in f32 (v5e VPU has
    # no bf16), accumulate in f32.
    x32 = x.astype(jnp.float32)
    out_2 = jnp.dot(x32 * x32, w2_ref[...], preferred_element_type=jnp.float32)  # (TB,1)

    interaction = 0.5 * (jnp.sum(xw * xw, axis=1, keepdims=True) - out_2)
    o_ref[...] = (interaction + x_lin + const_ref[0, 0]).astype(o_ref.dtype)


def fm_forward(x, weight, lin_w, bias, lin_b, *, stream_dtype=jnp.float32, tb=None):
    """FM forward.  x: (B, F), weight: (F, K), lin_w: (F, 1), bias/lin_b: (1, 1)."""
    B, F = x.shape
    Fk, K = weight.shape
    assert Fk == F and lin_w.shape == (F, 1)

    itemsize = jnp.dtype(stream_dtype).itemsize

    # Pick the batch tile: big enough to amortize per-step overhead (>=512 when
    # possible), small enough that the double-buffered X stream fits a VMEM
    # budget that also works on v7x (64 MiB physical / 32 MiB default scoped).
    if tb is None:
        per_buf_budget = 16 * 1024 * 1024           # per X buffer (x2 for double-buffering)
        tb = min(1024, max(8, per_buf_budget // max(1, F * itemsize)))
    tb = min(tb, ((B + 7) // 8) * 8)                # no bigger than the (padded) batch
    tb = max(8, (tb // 8) * 8)                      # sublane-aligned

    num_tiles = pl.cdiv(B, tb)
    b_pad = num_tiles * tb
    if b_pad != B:
        x = jnp.pad(x, ((0, b_pad - B), (0, 0)))    # zero rows -> harmless, sliced off

    # Fused / precomputed operands.
    rhs = jnp.concatenate([weight, lin_w], axis=1).astype(stream_dtype)          # (F, K+1)
    w2sum = jnp.sum(jnp.square(weight.astype(jnp.float32)), axis=1, keepdims=True)  # (F, 1)
    const = (0.5 * bias + lin_b).reshape(1, 1).astype(jnp.float32)               # (1, 1)
    x_s = x.astype(stream_dtype)

    out = pl.pallas_call(
        fm_kernel,
        out_shape=jax.ShapeDtypeStruct((b_pad, 1), jnp.float32),
        grid_spec=pltpu.PrefetchScalarGridSpec(
            num_scalar_prefetch=0,
            grid=(num_tiles,),
            in_specs=[
                pl.BlockSpec((tb, F), lambda i: (i, 0)),       # X stream (pipelined)
                pl.BlockSpec((F, K + 1), lambda i: (0, 0)),    # [W | Wl]  (resident)
                pl.BlockSpec((F, 1), lambda i: (0, 0)),        # sum_k W^2 (resident)
                pl.BlockSpec(memory_space=pltpu.SMEM),         # folded scalar
            ],
            out_specs=pl.BlockSpec((tb, 1), lambda i: (i, 0)),
        ),
        compiler_params=pltpu.CompilerParams(
            dimension_semantics=("parallel",),                 # batch axis -> megacore
            vmem_limit_bytes=48 * 1024 * 1024,
        ),
    )(x_s, rhs, w2sum, const)

    return out[:B]


def fm_reference(x, weight, lin_w, bias, lin_b):
    out_1 = jnp.sum((x @ weight) ** 2, axis=1, keepdims=True) + bias
    out_2 = jnp.sum((x ** 2) @ (weight ** 2), axis=1, keepdims=True)
    out_interaction = (out_1 - out_2) / 2
    out_linear = x @ lin_w + lin_b
    return out_interaction + out_linear


def _make_params(key, F, K):
    k_x, k_w, k_lw, k_b, k_lb = jax.random.split(key, 5)
    # FM weight: xavier_uniform on (F, K)
    wb = math.sqrt(6.0 / (F + K))
    weight = jax.random.uniform(k_w, (F, K), jnp.float32, -wb, wb)
    # FM bias: xavier_uniform on (1, 1)
    bb = math.sqrt(6.0 / 2.0)
    bias = jax.random.uniform(k_b, (1, 1), jnp.float32, -bb, bb)
    # nn.Linear(F, 1): default PyTorch init bound 1/sqrt(F); stored as (F, 1)
    lb_bound = 1.0 / math.sqrt(F)
    lin_w = jax.random.uniform(k_lw, (F, 1), jnp.float32, -lb_bound, lb_bound)
    lin_b = jax.random.uniform(k_lb, (1, 1), jnp.float32, -lb_bound, lb_bound)
    return k_x, weight, lin_w, bias, lin_b


if __name__ == "__main__":
    # --- small f32 case ----------------------------------------------------
    B, F, K = 8, 16, 2
    key = jax.random.PRNGKey(0)
    k_x, weight, lin_w, bias, lin_b = _make_params(key, F, K)
    x = jax.random.normal(k_x, (B, F), dtype=jnp.float32)

    out = jax.block_until_ready(fm_forward(x, weight, lin_w, bias, lin_b))
    ref = fm_reference(x, weight, lin_w, bias[0, 0], lin_b[0, 0])
    assert out.shape == (B, 1)
    assert jnp.allclose(out, ref, atol=1e-5, rtol=1e-5), "f32 mismatch vs reference"

    # --- exercise batch tiling + padding (B not a multiple of the tile) ----
    B2, F2 = 300, 64
    key2 = jax.random.PRNGKey(1)
    k_x2, weight2, lin_w2, bias2, lin_b2 = _make_params(key2, F2, K)
    x2 = jax.random.normal(k_x2, (B2, F2), dtype=jnp.float32)

    out2 = jax.block_until_ready(
        fm_forward(x2, weight2, lin_w2, bias2, lin_b2, tb=64))     # grid=(5,), pad 300->320
    ref2 = fm_reference(x2, weight2, lin_w2, bias2[0, 0], lin_b2[0, 0])
    assert out2.shape == (B2, 1)
    assert jnp.allclose(out2, ref2, atol=1e-4, rtol=1e-4), "tiled f32 mismatch vs reference"

    # --- bf16-streamed variant (halves HBM bytes; looser tolerance) --------
    out_bf16 = jax.block_until_ready(
        fm_forward(x, weight, lin_w, bias, lin_b, stream_dtype=jnp.bfloat16))
    assert jnp.allclose(out_bf16, ref, atol=5e-2, rtol=5e-2), "bf16 mismatch vs reference"

    print("KERNEL_OK")
</pallas_src>

<mosaic_0001>
module attributes {stable_mosaic.version = 11 : i64} {
  func.func @fm_kernel(%arg0: i32, %arg1: memref<8x16xf32, #tpu.memory_space<vmem>>, %arg2: memref<16x3xf32, #tpu.memory_space<vmem>>, %arg3: memref<16x1xf32, #tpu.memory_space<vmem>>, %arg4: memref<1x1xf32, #tpu.memory_space<smem>>, %arg5: memref<8x1xf32, #tpu.memory_space<vmem>>) attributes {dimension_semantics = [#tpu.dimension_semantics<parallel>], iteration_bounds = array<i64: 1>, scalar_prefetch = 0 : i64, scratch_operands = 0 : i64, tpu.core_type = #tpu.core_type<tc>, window_params = [{transform_indices = @transform_0, window_bounds = array<i64: 8, 16>}, {pipeline_mode = #tpu.pipeline_mode<synchronous>, transform_indices = @transform_1, window_bounds = array<i64: 16, 3>}, {pipeline_mode = #tpu.pipeline_mode<synchronous>, transform_indices = @transform_2, window_bounds = array<i64: 16, 1>}, {transform_indices = @transform_3, window_bounds = array<i64: 1, 1>}, {transform_indices = @transform_4, window_bounds = array<i64: 8, 1>}]} {
    %c0 = arith.constant 0 : index
    %c0_0 = arith.constant 0 : index
    %0 = vector.load %arg1[%c0, %c0_0] : memref<8x16xf32, #tpu.memory_space<vmem>>, vector<8x16xf32>
    %c0_1 = arith.constant 0 : index
    %c0_2 = arith.constant 0 : index
    %1 = vector.load %arg2[%c0_1, %c0_2] : memref<16x3xf32, #tpu.memory_space<vmem>>, vector<16x3xf32>
    %cst = arith.constant dense<0.000000e+00> : vector<8x3xf32>
    %2 = tpu.matmul %0, %1, %cst {dimension_numbers = #tpu.dot_dimension_numbers<[1], [0], [0], [1], [0, 0, 1, 1], [], []>} : vector<8x16xf32>, vector<16x3xf32>, vector<8x3xf32> -> vector<8x3xf32>
    %3 = vector.extract_strided_slice %2 {offsets = [0, 0], sizes = [8, 2], strides = [1, 1]} : vector<8x3xf32> to vector<8x2xf32>
    %4 = vector.extract_strided_slice %2 {offsets = [0, 2], sizes = [8, 1], strides = [1, 1]} : vector<8x3xf32> to vector<8x1xf32>
    %5 = arith.mulf %0, %0 : vector<8x16xf32>
    %c0_3 = arith.constant 0 : index
    %c0_4 = arith.constant 0 : index
    %6 = vector.load %arg3[%c0_3, %c0_4] : memref<16x1xf32, #tpu.memory_space<vmem>>, vector<16x1xf32>
    %cst_5 = arith.constant dense<0.000000e+00> : vector<8x1xf32>
    %7 = tpu.matmul %5, %6, %cst_5 {dimension_numbers = #tpu.dot_dimension_numbers<[1], [0], [0], [1], [0, 0, 1, 1], [], []>} : vector<8x16xf32>, vector<16x1xf32>, vector<8x1xf32> -> vector<8x1xf32>
    %8 = arith.mulf %3, %3 : vector<8x2xf32>
    %cst_6 = arith.constant dense<0.000000e+00> : vector<8xf32>
    %9 = vector.multi_reduction <add>, %8, %cst_6 [1] : vector<8x2xf32> to vector<8xf32>
    %10 = vector.shape_cast %9 : vector<8xf32> to vector<8x1xf32>
    %11 = arith.subf %10, %7 : vector<8x1xf32>
    %cst_7 = arith.constant 5.000000e-01 : f32
    %12 = vector.broadcast %cst_7 : f32 to vector<8x1xf32>
    %13 = arith.mulf %12, %11 : vector<8x1xf32>
    %14 = arith.addf %13, %4 : vector<8x1xf32>
    %c0_8 = arith.constant 0 : index
    %c0_9 = arith.constant 0 : index
    %15 = memref.load %arg4[%c0_8, %c0_9] : memref<1x1xf32, #tpu.memory_space<smem>>
    %16 = vector.broadcast %15 : f32 to vector<8x1xf32>
    %17 = arith.addf %14, %16 : vector<8x1xf32>
    %c0_10 = arith.constant 0 : index
    %c0_11 = arith.constant 0 : index
    %18 = vector.load %arg5[%c0_10, %c0_11] : memref<8x1xf32, #tpu.memory_space<vmem>>, vector<8x1xf32>
    tpu.vector_store %arg5[%c0_10, %c0_11], %17 {strides = array<i32>} : memref<8x1xf32, #tpu.memory_space<vmem>>, vector<8x1xf32>,
    return
  }
  func.func @transform_0(%arg0: i32) -> (i32, i32) {
    %c0_i32 = arith.constant 0 : i32
    %c0_i32_0 = arith.constant 0 : i32
    return %arg0, %c0_i32 : i32, i32
  }
  func.func @transform_1(%arg0: i32) -> (i32, i32) {
    %c0_i32 = arith.constant 0 : i32
    %c0_i32_0 = arith.constant 0 : i32
    %c0_i32_1 = arith.constant 0 : i32
    return %c0_i32, %c0_i32_0 : i32, i32
  }
  func.func @transform_2(%arg0: i32) -> (i32, i32) {
    %c0_i32 = arith.constant 0 : i32
    %c0_i32_0 = arith.constant 0 : i32
    %c0_i32_1 = arith.constant 0 : i32
    return %c0_i32, %c0_i32_0 : i32, i32
  }
  func.func @transform_3(%arg0: i32) -> (i32, i32) {
    %c0_i32 = arith.constant 0 : i32
    %c0_i32_0 = arith.constant 0 : i32
    %c0_i32_1 = arith.constant 0 : i32
    return %c0_i32, %c0_i32_0 : i32, i32
  }
  func.func @transform_4(%arg0: i32) -> (i32, i32) {
    %c0_i32 = arith.constant 0 : i32
    %c0_i32_0 = arith.constant 0 : i32
    return %arg0, %c0_i32 : i32, i32
  }
}

</mosaic_0001>

<llo_original>
// kernel: tpu_custom_call.1
$region0: #{tpu_custom_call.1}
  #allocation0 [shape = 'u32[]', space=smem, size = 0x4, offset = 0x4, fixed_abs, tag = 'smem constant byte address 0x4 - core index']
  #allocation1 [shape = 'u32[144,128]{1,0:T(1,128)}', space=vmem, size = 0x12000, scoped, tag = 'internal scratch']
  #allocation2 [shape = 'f32[1,1]{1,0:T(1,128)S(6)}', space=smem, size = 0x200, scoped, tag = 'scoped memory for tpu_custom_call.1']
  %s0 = inlined_call_operand.vmem [shape: f32[8,16], index: 0, kind: input, shape index: {}]
  %s1 = inlined_call_operand.vmem [shape: f32[16,3], index: 1, kind: input, shape index: {}]
  %s2 = inlined_call_operand.vmem [shape: f32[16,1], index: 2, kind: input, shape index: {}]
  %s3 = inlined_call_operand.<no memory space> [shape: f32[1,1], index: 3, kind: input, shape index: {}]
  %s4 = inlined_call_operand.vmem [shape: f32[8,1], index: 4, kind: output, shape index: {}]
  %s5 = sld [smem:[#allocation0]]
  $region26: #{tpu_custom_call.1} parent=0
    _
  %s7 = ssub.s32 1, %s5
  %s8 = scalar_select 0, %s7, %s5
  %9 = sst [smem:[#allocation2]] %s3
  // Predicated region
  $region2: #{tpu_custom_call.1} parent=0 // pred_check
    _
  $region3: #{tpu_custom_call.1} parent=0 // pred_check_branch
    %11 = sbr.rel (0) target = $region5
  $region4: #{tpu_custom_call.1} parent=0 // pred_region
    _
  $region5: #{tpu_custom_call.1} parent=0 // pred_fallthru
    _
  // Predicated region
  $region6: #{tpu_custom_call.1} parent=0 // pred_check
    _
  $region7: #{tpu_custom_call.1} parent=0 // pred_check_branch
    %13 = sbr.rel (0) target = $region9
  $region8: #{tpu_custom_call.1} parent=0 // pred_region
    _
  $region9: #{tpu_custom_call.1} parent=0 // pred_fallthru
    _
  // Predicated region
  $region10: #{tpu_custom_call.1} parent=0 // pred_check
    _
  $region11: #{tpu_custom_call.1} parent=0 // pred_check_branch
    %15 = sbr.rel (0) target = $region13
  $region12: #{tpu_custom_call.1} parent=0 // pred_region
    _
  $region13: #{tpu_custom_call.1} parent=0 // pred_fallthru
    _
  // Predicated region
  $region14: #{tpu_custom_call.1} parent=0 // pred_check
    _
  $region15: #{tpu_custom_call.1} parent=0 // pred_check_branch
    %17 = sbr.rel (0) target = $region17
  $region16: #{tpu_custom_call.1} parent=0 // pred_region
    _
  $region17: #{tpu_custom_call.1} parent=0 // pred_fallthru
    _
  %v18 = vld [vmem:[%s0] sm:$0xff]
  %v19 = vld [vmem:[%s1] sm:$0xff]
  %v20 = vld [vmem:[%s1 + $0x8] sm:$0xff]
  %vm21 = vcmask 130048
  %v23 = vsel %vm21, %v18, 0
  %25 = vmatprep.subr.mxu0 0.0
  %26 = vmatpush1.msra.mxu0 %v19
  %27 = vmatprep.subr.mxu0 0.0
  %28 = vmatpush1.msra.mxu0 %v20
  %29 = vmatprep.subr.mxu0 0.0
  %30 = vmatpush1.msra.mxu0 0.0
  %31 = vmatprep.subr.mxu0 0.0
  %32 = vmatpush1.msra.mxu0 0.0
  %33 = vmatprep.subr.mxu0 0.0
  %34 = vmatpush1.msra.mxu0 0.0
  %35 = vmatprep.subr.mxu0 0.0
  %36 = vmatpush1.msra.mxu0 0.0
  %37 = vmatprep.subr.mxu0 0.0
  %38 = vmatpush1.msra.mxu0 0.0
  %39 = vmatprep.subr.mxu0 0.0
  %40 = vmatpush1.msra.mxu0 0.0
  %41 = vmatprep.subr.mxu0 0.0
  %42 = vmatpush1.msra.mxu0 0.0
  %43 = vmatprep.subr.mxu0 0.0
  %44 = vmatpush1.msra.mxu0 0.0
  %45 = vmatprep.subr.mxu0 0.0
  %46 = vmatpush1.msra.mxu0 0.0
  %47 = vmatprep.subr.mxu0 0.0
  %48 = vmatpush1.msra.mxu0 0.0
  %49 = vmatprep.subr.mxu0 0.0
  %50 = vmatpush1.msra.mxu0 0.0
  %51 = vmatprep.subr.mxu0 0.0
  %52 = vmatpush1.msra.mxu0 0.0
  %53 = vmatprep.subr.mxu0 0.0
  %54 = vmatpush1.msra.mxu0 0.0
  %55 = vmatprep.subr.mxu0 0.0
  %56 = vmatpush1.msra.mxu0 0.0
  %57 = vmatprep.subr.mxu0 0.0
  %58 = vmatpush1.msra.mxu0 0.0
  %59 = vmatprep.subr.mxu0 0.0
  %60 = vmatpush1.msra.mxu0 0.0
  %61 = vmatprep.subr.mxu0 0.0
  %62 = vmatpush1.msra.mxu0 0.0
  %63 = vmatprep.subr.mxu0 0.0
  %64 = vmatpush1.msra.mxu0 0.0
  %65 = vmatprep.subr.mxu0 0.0
  %66 = vmatpush1.msra.mxu0 0.0
  %67 = vmatprep.subr.mxu0 0.0
  %68 = vmatpush1.msra.mxu0 0.0
  %69 = vmatprep.subr.mxu0 0.0
  %70 = vmatpush1.msra.mxu0 0.0
  %71 = vmatprep.subr.mxu0 0.0
  %72 = vmatpush1.msra.mxu0 0.0
  %73 = vmatprep.subr.mxu0 0.0
  %74 = vmatpush1.msra.mxu0 0.0
  %75 = vmatprep.subr.mxu0 0.0
  %76 = vmatpush1.msra.mxu0 0.0
  %77 = vmatprep.subr.mxu0 0.0
  %78 = vmatpush1.msra.mxu0 0.0
  %79 = vmatprep.subr.mxu0 0.0
  %80 = vmatpush1.msra.mxu0 0.0
  %81 = vmatprep.subr.mxu0 0.0
  %82 = vmatpush1.msra.mxu0 0.0
  %83 = vmatprep.subr.mxu0 0.0
  %84 = vmatpush1.msra.mxu0 0.0
  %85 = vmatprep.subr.mxu0 0.0
  %86 = vmatpush1.msra.mxu0 0.0
  %87 = vmatprep.subr.mxu0 0.0
  %88 = vmatpush1.msra.mxu0 0.0
  %89 = vmatprep.mubr.f32.mxu0 0.0
  %90 = vmatmul.mubr.f32.gmra.mrb[0].mxu0 %v23
  %v91 = vpop.f32.mrb[0].mxu0
  %v92 = vadd.f32 0.0, %v91
  %v93 = vpop.f32.mrb[0].mxu0
  %94 = vdwg.mxu0
  %v95 = vmul.f32 %v18, %v18
  %v96 = vld [vmem:[%s2] sm:$0xff]
  %v97 = vld [vmem:[%s2 + $0x8] sm:$0xff]
  %v99 = vsel %vm21, %v95, 0
  %101 = vmatprep.subr.mxu0 0.0
  %102 = vmatpush1.msra.mxu0 %v96
  %103 = vmatprep.subr.mxu0 0.0
  %104 = vmatpush1.msra.mxu0 %v97
  %105 = vmatprep.subr.mxu0 0.0
  %106 = vmatpush1.msra.mxu0 0.0
  %107 = vmatprep.subr.mxu0 0.0
  %108 = vmatpush1.msra.mxu0 0.0
  %109 = vmatprep.subr.mxu0 0.0
  %110 = vmatpush1.msra.mxu0 0.0
  %111 = vmatprep.subr.mxu0 0.0
  %112 = vmatpush1.msra.mxu0 0.0
  %113 = vmatprep.subr.mxu0 0.0
  %114 = vmatpush1.msra.mxu0 0.0
  %115 = vmatprep.subr.mxu0 0.0
  %116 = vmatpush1.msra.mxu0 0.0
  %117 = vmatprep.subr.mxu0 0.0
  %118 = vmatpush1.msra.mxu0 0.0
  %119 = vmatprep.subr.mxu0 0.0
  %120 = vmatpush1.msra.mxu0 0.0
  %121 = vmatprep.subr.mxu0 0.0
  %122 = vmatpush1.msra.mxu0 0.0
  %123 = vmatprep.subr.mxu0 0.0
  %124 = vmatpush1.msra.mxu0 0.0
  %125 = vmatprep.subr.mxu0 0.0
  %126 = vmatpush1.msra.mxu0 0.0
  %127 = vmatprep.subr.mxu0 0.0
  %128 = vmatpush1.msra.mxu0 0.0
  %129 = vmatprep.subr.mxu0 0.0
  %130 = vmatpush1.msra.mxu0 0.0
  %131 = vmatprep.subr.mxu0 0.0
  %132 = vmatpush1.msra.mxu0 0.0
  %133 = vmatprep.subr.mxu0 0.0
  %134 = vmatpush1.msra.mxu0 0.0
  %135 = vmatprep.subr.mxu0 0.0
  %136 = vmatpush1.msra.mxu0 0.0
  %137 = vmatprep.subr.mxu0 0.0
  %138 = vmatpush1.msra.mxu0 0.0
  %139 = vmatprep.subr.mxu0 0.0
  %140 = vmatpush1.msra.mxu0 0.0
  %141 = vmatprep.subr.mxu0 0.0
  %142 = vmatpush1.msra.mxu0 0.0
  %143 = vmatprep.subr.mxu0 0.0
  %144 = vmatpush1.msra.mxu0 0.0
  %145 = vmatprep.subr.mxu0 0.0
  %146 = vmatpush1.msra.mxu0 0.0
  %147 = vmatprep.subr.mxu0 0.0
  %148 = vmatpush1.msra.mxu0 0.0
  %149 = vmatprep.subr.mxu0 0.0
  %150 = vmatpush1.msra.mxu0 0.0
  %151 = vmatprep.subr.mxu0 0.0
  %152 = vmatpush1.msra.mxu0 0.0
  %153 = vmatprep.subr.mxu0 0.0
  %154 = vmatpush1.msra.mxu0 0.0
  %155 = vmatprep.subr.mxu0 0.0
  %156 = vmatpush1.msra.mxu0 0.0
  %157 = vmatprep.subr.mxu0 0.0
  %158 = vmatpush1.msra.mxu0 0.0
  %159 = vmatprep.subr.mxu0 0.0
  %160 = vmatpush1.msra.mxu0 0.0
  %161 = vmatprep.subr.mxu0 0.0
  %162 = vmatpush1.msra.mxu0 0.0
  %163 = vmatprep.subr.mxu0 0.0
  %164 = vmatpush1.msra.mxu0 0.0
  %165 = vmatprep.mubr.f32.mxu0 0.0
  %166 = vmatmul.mubr.f32.gmra.mrb[0].mxu0 %v99
  %v167 = vpop.f32.mrb[0].mxu0
  %v168 = vadd.f32 0.0, %v167
  %v169 = vpop.f32.mrb[0].mxu0
  %170 = vdwg.mxu0
  %v171 = vmul.f32 %v92, %v92
  %vm172 = vcmask 15360
  %v173 = vsel %vm172, %v171, 0.0
  %174 = vadd.xlane.f32.xlu0 %v173
  %v175 = vpop.xlane.xlu0 %174
  %v176 = vsub.f32 %v175, %v168
  %v177 = vmul.f32 %v176, 0.5
  %179 = vrot.lane.b32.xlu0 %v92, 126
  %v180 = vpop.permute.xlu0 %179
  %v182 = vadd.f32 %v177, %v180
  %s183 = sld [smem:[#allocation2]]
  %v184 = vstv %s183
  %v185 = vadd.f32 %v182, %v184
  %vm186 = vcmask 7168
  %187 = vst.msk [vmem:[%s4] sm:$0xff] %vm186, %v185
  // Predicated region
  $region18: #{tpu_custom_call.1} parent=0 // pred_check
    _
  $region19: #{tpu_custom_call.1} parent=0 // pred_check_branch
    %189 = sbr.rel (0) target = $region21
  $region20: #{tpu_custom_call.1} parent=0 // pred_region
    _
  $region21: #{tpu_custom_call.1} parent=0 // pred_fallthru
    _
  // Predicated region
  $region22: #{tpu_custom_call.1} parent=0 // pred_check
    _
  $region23: #{tpu_custom_call.1} parent=0 // pred_check_branch
    %191 = sbr.rel (0) target = $region25
  $region24: #{tpu_custom_call.1} parent=0 // pred_region
    _
  $region25: #{tpu_custom_call.1} parent=0 // pred_fallthru
    _

</llo_original>
